<compile_context>
chip_gen: v5e
topology: v5e:2x2
jax: 0.10.0
libtpu: 0.0.40
codegen_flags: <defaults>
</compile_context>

<pallas_src>
import math
import functools

import jax
import jax.numpy as jnp
from jax import lax
from jax.experimental import pallas as pl
from jax.experimental.pallas import tpu as pltpu


# --------------------------------------------------------------------------------------
# Generation-aware VMEM limit and tile selection helpers.
# --------------------------------------------------------------------------------------
def _vmem_limit_bytes():
    """Physical VMEM minus headroom: v5e/v6e (128 MiB) -> ~104 MiB, v7x (64 MiB) -> ~40 MiB."""
    try:
        cap = int(pltpu.get_tpu_info().vmem_capacity_bytes)
    except Exception:
        cap = 64 * 1024 * 1024          # conservative fallback (v7x-sized)
    return max(32 * 1024 * 1024, cap - 24 * 1024 * 1024)


def _tile_candidates(l_pad):
    cands = sorted({t for t in (l_pad, 4096, 2048, 1024, 512, 256, 128)
                    if t <= l_pad and l_pad % t == 0}, reverse=True)
    return cands or [l_pad]


def _attn_vmem_bytes(c, tq, tk, isz, x_isz, out_isz):
    return (2 * tq * c * isz                 # q tiles (double buffered)
            + 4 * tk * c * isz               # k + v tiles (double buffered)
            + 2 * tq * c * x_isz             # residual x tiles
            + 2 * tq * c * out_isz           # output tiles
            + 2 * c * c * isz                # w_proj
            + tq * c * 4 + 2 * tq * 4        # acc / m / l scratch
            + 4 * tq * tk * 4)               # live f32 score / prob intermediates


def _gn_vmem_bytes(c, tl, isz, x_isz):
    return (2 * c * tl * x_isz               # x tiles (double buffered)
            + 6 * c * tl * isz               # q, k, v output tiles (double buffered)
            + c * tl * (4 + isz)             # x upcast + xn intermediates
            + 3 * c * tl * 4                 # (tl, 3C) f32 qkv result
            + 3 * c * c * isz + c * c * 4)   # fused qkv weight + group matrix


# --------------------------------------------------------------------------------------
# Kernel A (fused path): GroupNorm (single-pass stats) + fused qkv, one batch element.
# x block: (1, C, L);  q/k/v blocks: (1, L, C) in matmul dtype.
# --------------------------------------------------------------------------------------
def _gn_qkv_fused_kernel(x_ref, gamma_ref, beta_ref, gmat_ref, wt_ref, bt_ref,
                         q_ref, k_ref, v_ref, *, c, eps):
    x = x_ref[0].astype(jnp.float32)                                     # (C, L)
    # Single data pass: per-channel sum / sum-sq, combined into per-group stats with
    # one (C,C)@(C,2) dot (gmat is pre-scaled by 1/(L*cg); zero padding contributes 0).
    st = jnp.concatenate([jnp.sum(x, axis=1, keepdims=True),
                          jnp.sum(x * x, axis=1, keepdims=True)], axis=1)  # (C, 2)
    comb = jnp.dot(gmat_ref[...], st, preferred_element_type=jnp.float32)  # (C, 2)
    mean = comb[:, 0:1]
    var = comb[:, 1:2] - mean * mean
    inv_std = lax.rsqrt(var + eps)

    xn = ((x - mean) * inv_std * gamma_ref[...] + beta_ref[...]).astype(wt_ref.dtype)
    # Fused qkv: (C, L)^T @ (C, 3C) -> (L, 3C); the xn transpose happens once per element
    # here instead of once per kv step in the attention kernel.
    qkv = lax.dot_general(xn, wt_ref[...], (((0,), (0,)), ((), ())),
                          preferred_element_type=jnp.float32) + bt_ref[...]
    q_ref[0] = qkv[:, 0:c].astype(q_ref.dtype)          # q already scaled by 1/sqrt(C)
    k_ref[0] = qkv[:, c:2 * c].astype(k_ref.dtype)
    v_ref[0] = qkv[:, 2 * c:3 * c].astype(v_ref.dtype)


# --------------------------------------------------------------------------------------
# Kernel A (tiled path, pass 1): per-channel sum / sum-sq accumulated over L tiles,
# finalized to [mean, inv_std] on the last tile.  Output block (1, C, 2) is an accumulator.
# --------------------------------------------------------------------------------------
def _gn_stats_kernel(x_ref, gmat_ref, stats_ref, *, eps):
    li = pl.program_id(1)

    @pl.when(li == 0)
    def _():
        stats_ref[0] = jnp.zeros(stats_ref.shape[1:], jnp.float32)

    x = x_ref[0].astype(jnp.float32)                                     # (C, tL)
    st = jnp.concatenate([jnp.sum(x, axis=1, keepdims=True),
                          jnp.sum(x * x, axis=1, keepdims=True)], axis=1)  # (C, 2)
    stats_ref[0] += st

    @pl.when(li == pl.num_programs(1) - 1)
    def _():
        comb = jnp.dot(gmat_ref[...], stats_ref[0],
                       preferred_element_type=jnp.float32)               # (C, 2)
        mean = comb[:, 0:1]
        var = comb[:, 1:2] - mean * mean
        inv_std = lax.rsqrt(var + eps)
        stats_ref[0] = jnp.concatenate([mean, inv_std], axis=1)


# --------------------------------------------------------------------------------------
# Kernel A (tiled path, pass 2): apply GroupNorm + fused qkv per (batch, L-tile).
# --------------------------------------------------------------------------------------
def _gn_apply_qkv_kernel(x_ref, stats_ref, gamma_ref, beta_ref, wt_ref, bt_ref,
                         q_ref, k_ref, v_ref, *, c):
    x = x_ref[0].astype(jnp.float32)                                     # (C, tL)
    stats = stats_ref[0]                                                 # (C, 2)
    mean = stats[:, 0:1]
    inv_std = stats[:, 1:2]
    xn = ((x - mean) * inv_std * gamma_ref[...] + beta_ref[...]).astype(wt_ref.dtype)
    qkv = lax.dot_general(xn, wt_ref[...], (((0,), (0,)), ((), ())),
                          preferred_element_type=jnp.float32) + bt_ref[...]   # (tL, 3C)
    q_ref[0] = qkv[:, 0:c].astype(q_ref.dtype)
    k_ref[0] = qkv[:, c:2 * c].astype(k_ref.dtype)
    v_ref[0] = qkv[:, 2 * c:3 * c].astype(v_ref.dtype)


# --------------------------------------------------------------------------------------
# Kernel B: flash-style attention (online softmax over kv tiles) + proj + residual.
# q/k/v tiles arrive in (tile, C) layout -> score matmul is NT, PV is NN: no per-step
# transposes.  Grid (B, nq, nk); kv innermost / "arbitrary"; (m, l, acc) in VMEM scratch.
# --------------------------------------------------------------------------------------
def _flash_attn_proj_kernel(q_ref, k_ref, v_ref, x_ref, wp_ref, bp_ref, o_ref,
                            m_sc, l_sc, acc_sc, *, tk, l_valid, padded):
    kv = pl.program_id(2)

    @pl.when(kv == 0)
    def _():
        m_sc[...] = jnp.full(m_sc.shape, -jnp.inf, jnp.float32)
        l_sc[...] = jnp.zeros(l_sc.shape, jnp.float32)
        acc_sc[...] = jnp.zeros(acc_sc.shape, jnp.float32)

    q = q_ref[0]                                            # (tq, C), pre-scaled by 1/sqrt(C)
    k = k_ref[0]                                            # (tk, C)
    # scores[i, j] = sum_c q[i, c] * k[j, c]  -> (tq, tk), f32 accumulation on the MXU.
    s = lax.dot_general(q, k, (((1,), (1,)), ((), ())),
                        preferred_element_type=jnp.float32)
    if padded:
        # mask key columns that lie in the lane-padding region [l_valid, L_pad)
        col = kv * tk + lax.broadcasted_iota(jnp.int32, s.shape, 1)
        s = jnp.where(col < l_valid, s, -1e30)

    m_prev = m_sc[...]                                      # (tq, 1)
    m_new = jnp.maximum(m_prev, jnp.max(s, axis=-1, keepdims=True))
    alpha = jnp.exp(m_prev - m_new)
    # note: for tiny C on v6e/v7x a bf16 exp here roughly doubles EUP throughput
    # (accuracy trade-off); kept in f32 for parity with the reference.
    p = jnp.exp(s - m_new)                                  # (tq, tk), f32

    l_sc[...] = alpha * l_sc[...] + jnp.sum(p, axis=-1, keepdims=True)
    pv = jnp.dot(p.astype(v_ref.dtype), v_ref[0],
                 preferred_element_type=jnp.float32)        # (tq, C)
    acc_sc[...] = alpha * acc_sc[...] + pv
    m_sc[...] = m_new

    @pl.when(kv == pl.num_programs(2) - 1)
    def _():
        inv_l = pl.reciprocal(l_sc[...], approx=True)       # EUP reciprocal, (tq, 1)
        o = (acc_sc[...] * inv_l).astype(wp_ref.dtype)      # (tq, C)
        # proj[oc, i] = sum_c w_proj[oc, c] * o[i, c] -> (C, tq); transpose folded into dims.
        proj = lax.dot_general(wp_ref[...], o, (((1,), (1,)), ((), ())),
                               preferred_element_type=jnp.float32)
        proj = proj + bp_ref[...]                           # (C, 1) bias, f32
        o_ref[0] = (x_ref[0].astype(jnp.float32) + proj).astype(o_ref.dtype)


# --------------------------------------------------------------------------------------
# Wrapper
# --------------------------------------------------------------------------------------
def self_attention(x_nchw, gamma, beta, w_qkv, b_qkv, w_proj, b_proj, *,
                   eps=1e-5, matmul_dtype=jnp.bfloat16,
                   gn_block_l=None, attn_block_q=None, attn_block_k=None):
    """x_nchw: (B, C, H, W); weights follow PyTorch Conv1d (out, in[, 1]) conventions."""
    b, c, h, w = x_nchw.shape
    L = h * w
    num_groups = min(16, c)                      # matches nn.GroupNorm(min(16, ch), ch)
    if c % num_groups != 0:
        raise ValueError(f"channels ({c}) must be divisible by num_groups ({num_groups})")
    cg = c // num_groups
    inv_sqrt_c = 1.0 / math.sqrt(c)

    # NCHW -> (B, C, L) is a free reshape; pad L up to a lane multiple if needed.
    L_pad = ((L + 127) // 128) * 128
    padded = L_pad != L
    x_bcl = x_nchw.reshape(b, c, L)
    if padded:
        x_bcl = jnp.pad(x_bcl, ((0, 0), (0, 0), (0, L_pad - L)))

    # Group-combination matrix for single-pass GroupNorm stats (uses the REAL count L*cg,
    # so zero padding does not perturb the statistics).
    grp = jnp.arange(c, dtype=jnp.int32) // cg
    gmat = (grp[:, None] == grp[None, :]).astype(jnp.float32) / jnp.float32(L * cg)

    gamma_col = jnp.asarray(gamma, jnp.float32).reshape(c, 1)
    beta_col = jnp.asarray(beta, jnp.float32).reshape(c, 1)

    # Fused qkv weight, stored transposed (C_in, 3C) with the 1/sqrt(C) attention scale
    # folded into the q columns (and the q bias).
    w_qkv2 = jnp.asarray(w_qkv, jnp.float32).reshape(3 * c, c)
    b_qkv2 = jnp.asarray(b_qkv, jnp.float32).reshape(3 * c)
    scale = jnp.concatenate([jnp.full((c,), inv_sqrt_c, jnp.float32),
                             jnp.ones((2 * c,), jnp.float32)])
    w_qkv_t = (w_qkv2 * scale[:, None]).T.astype(matmul_dtype)      # (C, 3C)
    b_qkv_row = (b_qkv2 * scale).reshape(1, 3 * c)                   # f32

    wp = jnp.asarray(w_proj, jnp.float32).reshape(c, c).astype(matmul_dtype)
    bp = jnp.asarray(b_proj, jnp.float32).reshape(c, 1)

    isz = jnp.dtype(matmul_dtype).itemsize
    x_isz = jnp.dtype(x_nchw.dtype).itemsize
    out_isz = x_isz
    vmem_limit = _vmem_limit_bytes()
    budget = int(0.8 * vmem_limit)
    cands_l = _tile_candidates(L_pad)

    qkv_shapes = [jax.ShapeDtypeStruct((b, L_pad, c), matmul_dtype)] * 3

    # ---- kernel A: GroupNorm + fused qkv ----------------------------------------------
    if gn_block_l is None:
        use_fused_gn = _gn_vmem_bytes(c, L_pad, isz, x_isz) <= budget
        tla = L_pad if use_fused_gn else next(
            (t for t in cands_l if _gn_vmem_bytes(c, t, isz, x_isz) <= budget),
            cands_l[-1])
    else:
        if gn_block_l % 128 != 0 or L_pad % gn_block_l != 0:
            raise ValueError(f"gn_block_l={gn_block_l} must be a 128-multiple divisor of {L_pad}")
        use_fused_gn = False
        tla = gn_block_l

    if use_fused_gn:
        # whole (C, L) block resident (fits the VMEM budget on this generation).
        # NOTE: with b == 1 this grid uses a single TensorCore; the tiled path below
        # provides the second parallel axis when L-tiling is needed anyway.
        q, k, v = pl.pallas_call(
            functools.partial(_gn_qkv_fused_kernel, c=c, eps=eps),
            out_shape=qkv_shapes,
            grid_spec=pltpu.PrefetchScalarGridSpec(
                num_scalar_prefetch=0,
                grid=(b,),
                in_specs=[
                    pl.BlockSpec((1, c, L_pad), lambda i: (i, 0, 0)),   # x
                    pl.BlockSpec((c, 1), lambda i: (0, 0)),             # gamma
                    pl.BlockSpec((c, 1), lambda i: (0, 0)),             # beta
                    pl.BlockSpec((c, c), lambda i: (0, 0)),             # group matrix
                    pl.BlockSpec((c, 3 * c), lambda i: (0, 0)),         # fused qkv weight^T
                    pl.BlockSpec((1, 3 * c), lambda i: (0, 0)),         # fused qkv bias
                ],
                out_specs=[pl.BlockSpec((1, L_pad, c), lambda i: (i, 0, 0))] * 3,
            ),
            compiler_params=pltpu.CompilerParams(
                dimension_semantics=("parallel",),
                vmem_limit_bytes=vmem_limit),
        )(x_bcl, gamma_col, beta_col, gmat, w_qkv_t, b_qkv_row)
    else:
        nla = L_pad // tla
        stats = pl.pallas_call(
            functools.partial(_gn_stats_kernel, eps=eps),
            out_shape=jax.ShapeDtypeStruct((b, c, 2), jnp.float32),
            grid_spec=pltpu.PrefetchScalarGridSpec(
                num_scalar_prefetch=0,
                grid=(b, nla),
                in_specs=[
                    pl.BlockSpec((1, c, tla), lambda i, j: (i, 0, j)),  # x tile
                    pl.BlockSpec((c, c), lambda i, j: (0, 0)),          # group matrix
                ],
                out_specs=pl.BlockSpec((1, c, 2), lambda i, j: (i, 0, 0)),
            ),
            compiler_params=pltpu.CompilerParams(
                dimension_semantics=("parallel", "arbitrary"),
                vmem_limit_bytes=vmem_limit),
        )(x_bcl, gmat)

        q, k, v = pl.pallas_call(
            functools.partial(_gn_apply_qkv_kernel, c=c),
            out_shape=qkv_shapes,
            grid_spec=pltpu.PrefetchScalarGridSpec(
                num_scalar_prefetch=0,
                grid=(b, nla),
                in_specs=[
                    pl.BlockSpec((1, c, tla), lambda i, j: (i, 0, j)),  # x tile
                    pl.BlockSpec((1, c, 2), lambda i, j: (i, 0, 0)),    # [mean, inv_std]
                    pl.BlockSpec((c, 1), lambda i, j: (0, 0)),          # gamma
                    pl.BlockSpec((c, 1), lambda i, j: (0, 0)),          # beta
                    pl.BlockSpec((c, 3 * c), lambda i, j: (0, 0)),      # fused qkv weight^T
                    pl.BlockSpec((1, 3 * c), lambda i, j: (0, 0)),      # fused qkv bias
                ],
                out_specs=[pl.BlockSpec((1, tla, c), lambda i, j: (i, j, 0))] * 3,
            ),
            compiler_params=pltpu.CompilerParams(
                dimension_semantics=("parallel", "parallel"),   # both axes megacore-splittable
                vmem_limit_bytes=vmem_limit),
        )(x_bcl, stats, gamma_col, beta_col, w_qkv_t, b_qkv_row)

    # ---- kernel B: flash attention + proj + residual ----------------------------------
    if attn_block_k is None:
        tk = next((t for t in cands_l if t <= 512), cands_l[-1])
    else:
        if attn_block_k % 128 != 0 or L_pad % attn_block_k != 0:
            raise ValueError(f"attn_block_k={attn_block_k} must be a 128-multiple divisor of {L_pad}")
        tk = attn_block_k
    if attn_block_q is None:
        # tq sized to the per-generation VMEM budget: larger tq -> fewer K/V HBM re-reads.
        tq = next((t for t in cands_l
                   if _attn_vmem_bytes(c, t, tk, isz, x_isz, out_isz) <= budget),
                  cands_l[-1])
    else:
        if attn_block_q % 128 != 0 or L_pad % attn_block_q != 0:
            raise ValueError(f"attn_block_q={attn_block_q} must be a 128-multiple divisor of {L_pad}")
        tq = attn_block_q
    nq = L_pad // tq
    nk = L_pad // tk

    out_bcl = pl.pallas_call(
        functools.partial(_flash_attn_proj_kernel, tk=tk, l_valid=L, padded=padded),
        out_shape=jax.ShapeDtypeStruct((b, c, L_pad), x_nchw.dtype),
        grid_spec=pltpu.PrefetchScalarGridSpec(
            num_scalar_prefetch=0,
            grid=(b, nq, nk),
            in_specs=[
                pl.BlockSpec((1, tq, c), lambda bi, qi, ki: (bi, qi, 0)),  # q tile (tq, C)
                # k/v: optionally pipeline_mode=pl.Buffered(3) if xprof shows exposed DMA (v6e).
                pl.BlockSpec((1, tk, c), lambda bi, qi, ki: (bi, ki, 0)),  # k tile (tk, C)
                pl.BlockSpec((1, tk, c), lambda bi, qi, ki: (bi, ki, 0)),  # v tile (tk, C)
                pl.BlockSpec((1, c, tq), lambda bi, qi, ki: (bi, 0, qi)),  # residual x (C, tq)
                pl.BlockSpec((c, c), lambda bi, qi, ki: (0, 0)),           # w_proj
                pl.BlockSpec((c, 1), lambda bi, qi, ki: (0, 0)),           # b_proj
            ],
            out_specs=pl.BlockSpec((1, c, tq), lambda bi, qi, ki: (bi, 0, qi)),
            scratch_shapes=[
                pltpu.VMEM((tq, 1), jnp.float32),   # running max m
                pltpu.VMEM((tq, 1), jnp.float32),   # running denom l
                pltpu.VMEM((tq, c), jnp.float32),   # output accumulator
            ],
        ),
        compiler_params=pltpu.CompilerParams(
            dimension_semantics=("parallel", "parallel", "arbitrary"),
            vmem_limit_bytes=vmem_limit),
    )(q, k, v, x_bcl, wp, bp)

    if padded:
        out_bcl = out_bcl[:, :, :L]
    return out_bcl.reshape(b, c, h, w)


# --------------------------------------------------------------------------------------
# Pure-JAX reference matching the PyTorch module semantics.
# --------------------------------------------------------------------------------------
def _ref_forward(x, gamma, beta, w_qkv, b_qkv, w_proj, b_proj, num_groups, eps=1e-5):
    b, c, h, w = x.shape
    L = h * w
    xg = x.reshape(b, num_groups, c // num_groups, h, w)
    m = xg.mean(axis=(2, 3, 4), keepdims=True)
    var = ((xg - m) ** 2).mean(axis=(2, 3, 4), keepdims=True)
    xn = ((xg - m) / jnp.sqrt(var + eps)).reshape(b, c, h, w)
    xn = xn * gamma[None, :, None, None] + beta[None, :, None, None]
    flat = xn.reshape(b, c, L)
    qkv = jnp.einsum('oc,bcl->bol', w_qkv, flat) + b_qkv[None, :, None]
    q, k, v = jnp.split(qkv, 3, axis=1)
    q, k, v = [jnp.transpose(t, (0, 2, 1)) for t in (q, k, v)]
    attn = jax.nn.softmax(q @ jnp.transpose(k, (0, 2, 1)) / math.sqrt(c), axis=-1)
    o = jnp.transpose(attn @ v, (0, 2, 1))
    proj = jnp.einsum('oc,bcl->bol', w_proj, o) + b_proj[None, :, None]
    return x + proj.reshape(b, c, h, w)


if __name__ == "__main__":
    def make_inputs(key, b, c, h, w):
        ks = jax.random.split(key, 7)
        x = jax.random.normal(ks[0], (b, c, h, w), jnp.float32)
        gamma = 1.0 + 0.1 * jax.random.normal(ks[1], (c,), jnp.float32)
        beta = 0.1 * jax.random.normal(ks[2], (c,), jnp.float32)
        w_qkv = jax.random.normal(ks[3], (3 * c, c), jnp.float32) / math.sqrt(c)
        b_qkv = 0.1 * jax.random.normal(ks[4], (3 * c,), jnp.float32)
        w_proj = jax.random.normal(ks[5], (c, c), jnp.float32) / math.sqrt(c)
        b_proj = 0.1 * jax.random.normal(ks[6], (c,), jnp.float32)
        return x, gamma, beta, w_qkv, b_qkv, w_proj, b_proj

    k_a, k_b = jax.random.split(jax.random.PRNGKey(0))

    # 1) f32-MXU path, fused GroupNorm kernel, single kv tile (tight tolerance: only the
    #    approx reciprocal and matmul rounding differ from the reference).
    args = make_inputs(k_a, 2, 4, 16, 16)
    ref = _ref_forward(*args, num_groups=min(16, 4))
    out = jax.block_until_ready(self_attention(*args, matmul_dtype=jnp.float32))
    assert out.shape == args[0].shape and out.dtype == args[0].dtype
    err = float(jnp.max(jnp.abs(out - ref)))
    assert err < 3e-2, f"f32 fused path: max abs err = {err}"

    # 2) f32-MXU path with a non-lane-aligned spatial size (15x15 -> L=225 padded to 256),
    #    forced L-tiled GroupNorm stats and multi-tile online softmax with key masking.
    args2 = make_inputs(k_b, 2, 4, 15, 15)
    ref2 = _ref_forward(*args2, num_groups=min(16, 4))
    out2 = jax.block_until_ready(self_attention(
        *args2, matmul_dtype=jnp.float32,
        gn_block_l=128, attn_block_q=128, attn_block_k=128))
    assert out2.shape == args2[0].shape and out2.dtype == args2[0].dtype
    err2 = float(jnp.max(jnp.abs(out2 - ref2)))
    assert err2 < 3e-2, f"f32 tiled/padded path: max abs err = {err2}"

    # 3) bf16-MXU path (performance default): looser tolerance for bf16 operand rounding.
    out3 = jax.block_until_ready(self_attention(*args))
    assert out3.shape == args[0].shape and out3.dtype == args[0].dtype
    err3 = float(jnp.max(jnp.abs(out3 - ref)))
    assert err3 < 3e-1, f"bf16 path: max abs err = {err3}"

    print("KERNEL_OK")
</pallas_src>

<mosaic_0001>
module attributes {stable_mosaic.version = 11 : i64} {
  func.func @_gn_qkv_fused_kernel(%arg0: i32, %arg1: memref<1x4x256xf32, #tpu.memory_space<vmem>>, %arg2: memref<4x1xf32, #tpu.memory_space<vmem>>, %arg3: memref<4x1xf32, #tpu.memory_space<vmem>>, %arg4: memref<4x4xf32, #tpu.memory_space<vmem>>, %arg5: memref<4x12xf32, #tpu.memory_space<vmem>>, %arg6: memref<1x12xf32, #tpu.memory_space<vmem>>, %arg7: memref<1x256x4xf32, #tpu.memory_space<vmem>>, %arg8: memref<1x256x4xf32, #tpu.memory_space<vmem>>, %arg9: memref<1x256x4xf32, #tpu.memory_space<vmem>>) attributes {dimension_semantics = [#tpu.dimension_semantics<parallel>], iteration_bounds = array<i64: 2>, scalar_prefetch = 0 : i64, scratch_operands = 0 : i64, tpu.core_type = #tpu.core_type<tc>, window_params = [{transform_indices = @transform_0, window_bounds = array<i64: 1, 4, 256>}, {pipeline_mode = #tpu.pipeline_mode<synchronous>, transform_indices = @transform_1, window_bounds = array<i64: 4, 1>}, {pipeline_mode = #tpu.pipeline_mode<synchronous>, transform_indices = @transform_2, window_bounds = array<i64: 4, 1>}, {pipeline_mode = #tpu.pipeline_mode<synchronous>, transform_indices = @transform_3, window_bounds = array<i64: 4, 4>}, {pipeline_mode = #tpu.pipeline_mode<synchronous>, transform_indices = @transform_4, window_bounds = array<i64: 4, 12>}, {pipeline_mode = #tpu.pipeline_mode<synchronous>, transform_indices = @transform_5, window_bounds = array<i64: 1, 12>}, {transform_indices = @transform_6, window_bounds = array<i64: 1, 256, 4>}, {transform_indices = @transform_7, window_bounds = array<i64: 1, 256, 4>}, {transform_indices = @transform_8, window_bounds = array<i64: 1, 256, 4>}]} {
    %c0 = arith.constant 0 : index
    %c0_0 = arith.constant 0 : index
    %c0_1 = arith.constant 0 : index
    %0 = vector.load %arg1[%c0, %c0_0, %c0_1] : memref<1x4x256xf32, #tpu.memory_space<vmem>>, vector<1x4x256xf32>
    %1 = vector.shape_cast %0 : vector<1x4x256xf32> to vector<4x256xf32>
    %cst = arith.constant dense<0.000000e+00> : vector<4xf32>
    %2 = vector.multi_reduction <add>, %1, %cst [1] : vector<4x256xf32> to vector<4xf32>
    %3 = vector.shape_cast %2 : vector<4xf32> to vector<4x1xf32>
    %4 = arith.mulf %1, %1 : vector<4x256xf32>
    %cst_2 = arith.constant dense<0.000000e+00> : vector<4xf32>
    %5 = vector.multi_reduction <add>, %4, %cst_2 [1] : vector<4x256xf32> to vector<4xf32>
    %6 = vector.shape_cast %5 : vector<4xf32> to vector<4x1xf32>
    %7 = tpu.concatenate %3, %6 in 1 : vector<4x1xf32>, vector<4x1xf32> -> vector<4x2xf32>
    %c0_3 = arith.constant 0 : index
    %c0_4 = arith.constant 0 : index
    %8 = vector.load %arg4[%c0_3, %c0_4] : memref<4x4xf32, #tpu.memory_space<vmem>>, vector<4x4xf32>
    %cst_5 = arith.constant dense<0.000000e+00> : vector<4x2xf32>
    %9 = tpu.matmul %8, %7, %cst_5 {dimension_numbers = #tpu.dot_dimension_numbers<[1], [0], [0], [1], [0, 0, 1, 1], [], []>} : vector<4x4xf32>, vector<4x2xf32>, vector<4x2xf32> -> vector<4x2xf32>
    %10 = vector.extract_strided_slice %9 {offsets = [0, 0], sizes = [4, 1], strides = [1, 1]} : vector<4x2xf32> to vector<4x1xf32>
    %11 = vector.extract_strided_slice %9 {offsets = [0, 1], sizes = [4, 1], strides = [1, 1]} : vector<4x2xf32> to vector<4x1xf32>
    %12 = arith.mulf %10, %10 : vector<4x1xf32>
    %13 = arith.subf %11, %12 : vector<4x1xf32>
    %cst_6 = arith.constant 9.99999974E-6 : f32
    %14 = vector.broadcast %cst_6 : f32 to vector<4x1xf32>
    %15 = arith.addf %13, %14 : vector<4x1xf32>
    %16 = math.rsqrt %15 : vector<4x1xf32>
    %17 = vector.broadcast %10 : vector<4x1xf32> to vector<4x256xf32>
    %18 = arith.subf %1, %17 : vector<4x256xf32>
    %19 = vector.broadcast %16 : vector<4x1xf32> to vector<4x256xf32>
    %20 = arith.mulf %18, %19 : vector<4x256xf32>
    %c0_7 = arith.constant 0 : index
    %c0_8 = arith.constant 0 : index
    %21 = vector.load %arg2[%c0_7, %c0_8] : memref<4x1xf32, #tpu.memory_space<vmem>>, vector<4x1xf32>
    %22 = vector.broadcast %21 : vector<4x1xf32> to vector<4x256xf32>
    %23 = arith.mulf %20, %22 : vector<4x256xf32>
    %c0_9 = arith.constant 0 : index
    %c0_10 = arith.constant 0 : index
    %24 = vector.load %arg3[%c0_9, %c0_10] : memref<4x1xf32, #tpu.memory_space<vmem>>, vector<4x1xf32>
    %25 = vector.broadcast %24 : vector<4x1xf32> to vector<4x256xf32>
    %26 = arith.addf %23, %25 : vector<4x256xf32>
    %c0_11 = arith.constant 0 : index
    %c0_12 = arith.constant 0 : index
    %27 = vector.load %arg5[%c0_11, %c0_12] : memref<4x12xf32, #tpu.memory_space<vmem>>, vector<4x12xf32>
    %cst_13 = arith.constant dense<0.000000e+00> : vector<256x12xf32>
    %28 = tpu.matmul %26, %27, %cst_13 {dimension_numbers = #tpu.dot_dimension_numbers<[0], [0], [1], [1], [0, 1, 1, 1], [], []>} : vector<4x256xf32>, vector<4x12xf32>, vector<256x12xf32> -> vector<256x12xf32>
    %c0_14 = arith.constant 0 : index
    %c0_15 = arith.constant 0 : index
    %29 = vector.load %arg6[%c0_14, %c0_15] : memref<1x12xf32, #tpu.memory_space<vmem>>, vector<1x12xf32>
    %30 = vector.broadcast %29 : vector<1x12xf32> to vector<256x12xf32>
    %31 = arith.addf %28, %30 : vector<256x12xf32>
    %32 = vector.extract_strided_slice %31 {offsets = [0, 0], sizes = [256, 4], strides = [1, 1]} : vector<256x12xf32> to vector<256x4xf32>
    %c0_16 = arith.constant 0 : index
    %c0_17 = arith.constant 0 : index
    %c0_18 = arith.constant 0 : index
    %33 = vector.load %arg7[%c0_16, %c0_17, %c0_18] : memref<1x256x4xf32, #tpu.memory_space<vmem>>, vector<1x256x4xf32>
    %34 = vector.shape_cast %33 : vector<1x256x4xf32> to vector<256x4xf32>
    %35 = vector.shape_cast %32 : vector<256x4xf32> to vector<1x256x4xf32>
    tpu.vector_store %arg7[%c0_16, %c0_17, %c0_18], %35 {strides = array<i32>} : memref<1x256x4xf32, #tpu.memory_space<vmem>>, vector<1x256x4xf32>,
    %36 = vector.extract_strided_slice %31 {offsets = [0, 4], sizes = [256, 4], strides = [1, 1]} : vector<256x12xf32> to vector<256x4xf32>
    %c0_19 = arith.constant 0 : index
    %c0_20 = arith.constant 0 : index
    %c0_21 = arith.constant 0 : index
    %37 = vector.load %arg8[%c0_19, %c0_20, %c0_21] : memref<1x256x4xf32, #tpu.memory_space<vmem>>, vector<1x256x4xf32>
    %38 = vector.shape_cast %37 : vector<1x256x4xf32> to vector<256x4xf32>
    %39 = vector.shape_cast %36 : vector<256x4xf32> to vector<1x256x4xf32>
    tpu.vector_store %arg8[%c0_19, %c0_20, %c0_21], %39 {strides = array<i32>} : memref<1x256x4xf32, #tpu.memory_space<vmem>>, vector<1x256x4xf32>,
    %40 = vector.extract_strided_slice %31 {offsets = [0, 8], sizes = [256, 4], strides = [1, 1]} : vector<256x12xf32> to vector<256x4xf32>
    %c0_22 = arith.constant 0 : index
    %c0_23 = arith.constant 0 : index
    %c0_24 = arith.constant 0 : index
    %41 = vector.load %arg9[%c0_22, %c0_23, %c0_24] : memref<1x256x4xf32, #tpu.memory_space<vmem>>, vector<1x256x4xf32>
    %42 = vector.shape_cast %41 : vector<1x256x4xf32> to vector<256x4xf32>
    %43 = vector.shape_cast %40 : vector<256x4xf32> to vector<1x256x4xf32>
    tpu.vector_store %arg9[%c0_22, %c0_23, %c0_24], %43 {strides = array<i32>} : memref<1x256x4xf32, #tpu.memory_space<vmem>>, vector<1x256x4xf32>,
    return
  }
  func.func @transform_0(%arg0: i32) -> (i32, i32, i32) {
    %c0_i32 = arith.constant 0 : i32
    %c0_i32_0 = arith.constant 0 : i32
    %c0_i32_1 = arith.constant 0 : i32
    return %arg0, %c0_i32, %c0_i32_0 : i32, i32, i32
  }
  func.func @transform_1(%arg0: i32) -> (i32, i32) {
    %c0_i32 = arith.constant 0 : i32
    %c0_i32_0 = arith.constant 0 : i32
    %c0_i32_1 = arith.constant 0 : i32
    return %c0_i32, %c0_i32_0 : i32, i32
  }
  func.func @transform_2(%arg0: i32) -> (i32, i32) {
    %c0_i32 = arith.constant 0 : i32
    %c0_i32_0 = arith.constant 0 : i32
    %c0_i32_1 = arith.constant 0 : i32
    return %c0_i32, %c0_i32_0 : i32, i32
  }
  func.func @transform_3(%arg0: i32) -> (i32, i32) {
    %c0_i32 = arith.constant 0 : i32
    %c0_i32_0 = arith.constant 0 : i32
    %c0_i32_1 = arith.constant 0 : i32
    return %c0_i32, %c0_i32_0 : i32, i32
  }
  func.func @transform_4(%arg0: i32) -> (i32, i32) {
    %c0_i32 = arith.constant 0 : i32
    %c0_i32_0 = arith.constant 0 : i32
    %c0_i32_1 = arith.constant 0 : i32
    return %c0_i32, %c0_i32_0 : i32, i32
  }
  func.func @transform_5(%arg0: i32) -> (i32, i32) {
    %c0_i32 = arith.constant 0 : i32
    %c0_i32_0 = arith.constant 0 : i32
    %c0_i32_1 = arith.constant 0 : i32
    return %c0_i32, %c0_i32_0 : i32, i32
  }
  func.func @transform_6(%arg0: i32) -> (i32, i32, i32) {
    %c0_i32 = arith.constant 0 : i32
    %c0_i32_0 = arith.constant 0 : i32
    %c0_i32_1 = arith.constant 0 : i32
    return %arg0, %c0_i32, %c0_i32_0 : i32, i32, i32
  }
  func.func @transform_7(%arg0: i32) -> (i32, i32, i32) {
    %c0_i32 = arith.constant 0 : i32
    %c0_i32_0 = arith.constant 0 : i32
    %c0_i32_1 = arith.constant 0 : i32
    return %arg0, %c0_i32, %c0_i32_0 : i32, i32, i32
  }
  func.func @transform_8(%arg0: i32) -> (i32, i32, i32) {
    %c0_i32 = arith.constant 0 : i32
    %c0_i32_0 = arith.constant 0 : i32
    %c0_i32_1 = arith.constant 0 : i32
    return %arg0, %c0_i32, %c0_i32_0 : i32, i32, i32
  }
}

</mosaic_0001>

<llo_original>
// kernel: tpu_custom_call.1
$region0: #{tpu_custom_call.1}
  #allocation0 [shape = 'u32[]', space=smem, size = 0x4, offset = 0x4, fixed_abs, tag = 'smem constant byte address 0x4 - core index']
  #allocation1 [shape = 'u32[72,128]{1,0:T(1,128)}', space=vmem, size = 0x9000, scoped, tag = 'internal scratch']
  %s0 = inlined_call_operand.hbm [shape: f32[2,4,256], index: 0, kind: input, shape index: {}]
  %s1 = inlined_call_operand.vmem [shape: f32[4,1], index: 1, kind: input, shape index: {}]
  %s2 = inlined_call_operand.vmem [shape: f32[4,1], index: 2, kind: input, shape index: {}]
  %s3 = inlined_call_operand.vmem [shape: f32[4,4], index: 3, kind: input, shape index: {}]
  %s4 = inlined_call_operand.vmem [shape: f32[4,12], index: 4, kind: input, shape index: {}]
  %s5 = inlined_call_operand.vmem [shape: f32[1,12], index: 5, kind: input, shape index: {}]
  %s6 = inlined_call_operand.vmem [shape: f32[2,256,4], index: 6, kind: output, shape index: {0}]
  %s7 = inlined_call_operand.vmem [shape: f32[2,256,4], index: 7, kind: output, shape index: {1}]
  %s8 = inlined_call_operand.vmem [shape: f32[2,256,4], index: 8, kind: output, shape index: {2}]
  %9 = xla_tuple %s6, %s7, %s8
  %s10 = sld [smem:[#allocation0]]
  $region77: #{tpu_custom_call.1} parent=0
    _
  %s12 = ssub.s32 1, %s10
  %s13 = scalar_select 0, %s12, %s10
  $region1: #{tpu_custom_call.1} parent=0
    #allocation2 [shape = 'u8[8192]{0}', space=vmem, size = 0x2000, scoped, tag = 'input window, operand 0']
    #allocation3 [shape = 's32[2]{0}', space=sflag, size = 0x8, scoped, tag = 'scoped memory for tpu_custom_call.1']
    %14 = vsyncpa [#allocation3], 0
    %s15 = scalar_lea.sflag [#allocation3], 1
    %16 = vsyncpa %s15, 0
    loop: start=0, step=1, limit=4
    $region2: #{tpu_custom_call.1} parent=1 // loop_pre_header
      _
    $region3: #{tpu_custom_call.1} parent=1 // loop_header
      %s18 = sphi 0, %s22
      %p19 = scmp.ge.s32.totalorder %s18, 4
      %s28 = sphi 0, %s30
      %s31 = sphi 0, %s28
      %s32 = sphi 0, %s31
      %s48 = sphi 0, %s32
      %s52 = sphi 0, %s52
      %s54 = sphi 0, %s52
      %s55 = sphi 0, %s54
      %s69 = sphi 0, %s55
      %s73 = sphi 0, %s73
      %s75 = sphi 0, %s73
      %s76 = sphi 0, %s75
      %s90 = sphi 0, %s76
      %s94 = sphi 0, %s94
      %s96 = sphi 0, %s94
      %s97 = sphi 0, %s96
      %s111 = sphi 0, %s97
      %s115 = sphi 0, %s115
      %s117 = sphi 0, %s115
      %s118 = sphi 0, %s117
      %s132 = sphi 0, %s118
      %s136 = sphi 0, %s136
      %s138 = sphi 0, %s136
      %s139 = sphi 0, %s138
      %s153 = sphi 0, %s139
      %s159 = sphi 0, %s161
      %s162 = sphi 0, %s159
      %s163 = sphi 0, %s162
      %s179 = sphi 0, %s163
      %s185 = sphi 0, %s187
      %s188 = sphi 0, %s185
      %s189 = sphi 0, %s188
      %s205 = sphi 0, %s189
      %s211 = sphi 0, %s213
      %s214 = sphi 0, %s211
      %s215 = sphi 0, %s214
      %s231 = sphi 0, %s215
    $region4: #{tpu_custom_call.1} parent=1 // loop_header_branch
      %21 = sbr.rel (%p19) target = $region8
    $region5: #{tpu_custom_call.1} parent=1 // loop_body
      %s23 = ssub.s32 %s18, 1
      %s24 = ssub.s32 %s18, 2
      %s25 = sadd.s32 %s18, 1
      %s26 = ssub.s32 %s18, %s25
      %p27 = scmp.eq.s32.totalorder %s26, 0
      %s29 = sadd.s32 %s28, 1
      %s30 = scalar_select %p27, %s28, %s29
      %p33 = pneg %p27
      %p34 = scmp.eq.s32.totalorder %s18, 1
      %p35 = por %p33, %p34
      %p36 = scmp.ne.s32.totalorder %s28, %s31
      %p37 = scmp.eq.s32.totalorder %s18, 0
      %p38 = por %p36, %p37
      %p39 = scmp.ne.s32.totalorder %s28, %s31
      %p40 = scmp.eq.s32.totalorder %s23, 1
      %p41 = por %p39, %p40
      %p42 = scmp.ne.s32.totalorder %s31, %s32
      %p43 = scmp.eq.s32.totalorder %s23, 0
      %p44 = por %p42, %p43
      %p45 = scmp.ne.s32.totalorder %s31, %s32
      %p46 = scmp.eq.s32.totalorder %s24, 1
      %p47 = por %p45, %p46
      %p49 = scmp.ne.s32.totalorder %s32, %s48
      %p50 = scmp.eq.s32.totalorder %s24, 0
      %p51 = por %p49, %p50
      %s53 = sadd.s32 %s52, 1
      %p56 = scmp.eq.s32.totalorder %s18, 1
      %p57 = scmp.ne.s32.totalorder %s52, %s54
      %p58 = scmp.eq.s32.totalorder %s18, 0
      %p59 = por %p57, %p58
      %p60 = scmp.ne.s32.totalorder %s52, %s54
      %p61 = scmp.eq.s32.totalorder %s23, 1
      %p62 = por %p60, %p61
      %p63 = scmp.ne.s32.totalorder %s54, %s55
      %p64 = scmp.eq.s32.totalorder %s23, 0
      %p65 = por %p63, %p64
      %p66 = scmp.ne.s32.totalorder %s54, %s55
      %p67 = scmp.eq.s32.totalorder %s24, 1
      %p68 = por %p66, %p67
      %p70 = scmp.ne.s32.totalorder %s55, %s69
      %p71 = scmp.eq.s32.totalorder %s24, 0
      %p72 = por %p70, %p71
      %s74 = sadd.s32 %s73, 1
      %p77 = scmp.eq.s32.totalorder %s18, 1
      %p78 = scmp.ne.s32.totalorder %s73, %s75
      %p79 = scmp.eq.s32.totalorder %s18, 0
      %p80 = por %p78, %p79
      %p81 = scmp.ne.s32.totalorder %s73, %s75
      %p82 = scmp.eq.s32.totalorder %s23, 1
      %p83 = por %p81, %p82
      %p84 = scmp.ne.s32.totalorder %s75, %s76
      %p85 = scmp.eq.s32.totalorder %s23, 0
      %p86 = por %p84, %p85
      %p87 = scmp.ne.s32.totalorder %s75, %s76
      %p88 = scmp.eq.s32.totalorder %s24, 1
      %p89 = por %p87, %p88
      %p91 = scmp.ne.s32.totalorder %s76, %s90
      %p92 = scmp.eq.s32.totalorder %s24, 0
      %p93 = por %p91, %p92
      %s95 = sadd.s32 %s94, 1
      %p98 = scmp.eq.s32.totalorder %s18, 1
      %p99 = scmp.ne.s32.totalorder %s94, %s96
      %p100 = scmp.eq.s32.totalorder %s18, 0
      %p101 = por %p99, %p100
      %p102 = scmp.ne.s32.totalorder %s94, %s96
      %p103 = scmp.eq.s32.totalorder %s23, 1
      %p104 = por %p102, %p103
      %p105 = scmp.ne.s32.totalorder %s96, %s97
      %p106 = scmp.eq.s32.totalorder %s23, 0
      %p107 = por %p105, %p106
      %p108 = scmp.ne.s32.totalorder %s96, %s97
      %p109 = scmp.eq.s32.totalorder %s24, 1
      %p110 = por %p108, %p109
      %p112 = scmp.ne.s32.totalorder %s97, %s111
      %p113 = scmp.eq.s32.totalorder %s24, 0
      %p114 = por %p112, %p113
      %s116 = sadd.s32 %s115, 1
      %p119 = scmp.eq.s32.totalorder %s18, 1
      %p120 = scmp.ne.s32.totalorder %s115, %s117
      %p121 = scmp.eq.s32.totalorder %s18, 0
      %p122 = por %p120, %p121
      %p123 = scmp.ne.s32.totalorder %s115, %s117
      %p124 = scmp.eq.s32.totalorder %s23, 1
      %p125 = por %p123, %p124
      %p126 = scmp.ne.s32.totalorder %s117, %s118
      %p127 = scmp.eq.s32.totalorder %s23, 0
      %p128 = por %p126, %p127
      %p129 = scmp.ne.s32.totalorder %s117, %s118
      %p130 = scmp.eq.s32.totalorder %s24, 1
      %p131 = por %p129, %p130
      %p133 = scmp.ne.s32.totalorder %s118, %s132
      %p134 = scmp.eq.s32.totalorder %s24, 0
      %p135 = por %p133, %p134
      %s137 = sadd.s32 %s136, 1
      %p140 = scmp.eq.s32.totalorder %s18, 1
      %p141 = scmp.ne.s32.totalorder %s136, %s138
      %p142 = scmp.eq.s32.totalorder %s18, 0
      %p143 = por %p141, %p142
      %p144 = scmp.ne.s32.totalorder %s136, %s138
      %p145 = scmp.eq.s32.totalorder %s23, 1
      %p146 = por %p144, %p145
      %p147 = scmp.ne.s32.totalorder %s138, %s139
      %p148 = scmp.eq.s32.totalorder %s23, 0
      %p149 = por %p147, %p148
      %p150 = scmp.ne.s32.totalorder %s138, %s139
      %p151 = scmp.eq.s32.totalorder %s24, 1
      %p152 = por %p150, %p151
      %p154 = scmp.ne.s32.totalorder %s139, %s153
      %p155 = scmp.eq.s32.totalorder %s24, 0
      %p156 = por %p154, %p155
      %s157 = ssub.s32 %s18, %s25
      %p158 = scmp.eq.s32.totalorder %s157, 0
      %s160 = sadd.s32 %s159, 1
      %s161 = scalar_select %p158, %s159, %s160
      %p164 = pneg %p158
      %p165 = scmp.eq.s32.totalorder %s18, 1
      %p166 = por %p164, %p165
      %p167 = scmp.ne.s32.totalorder %s159, %s162
      %p168 = scmp.eq.s32.totalorder %s18, 0
      %p169 = por %p167, %p168
      %p170 = scmp.ne.s32.totalorder %s159, %s162
      %p171 = scmp.eq.s32.totalorder %s23, 1
      %p172 = por %p170, %p171
      %p173 = scmp.ne.s32.totalorder %s162, %s163
      %p174 = scmp.eq.s32.totalorder %s23, 0
      %p175 = por %p173, %p174
      %p176 = scmp.ne.s32.totalorder %s162, %s163
      %p177 = scmp.eq.s32.totalorder %s24, 1
      %p178 = por %p176, %p177
      %p180 = scmp.ne.s32.totalorder %s163, %s179
      %p181 = scmp.eq.s32.totalorder %s24, 0
      %p182 = por %p180, %p181
      %s183 = ssub.s32 %s18, %s25
      %p184 = scmp.eq.s32.totalorder %s183, 0
      %s186 = sadd.s32 %s185, 1
      %s187 = scalar_select %p184, %s185, %s186
      %p190 = pneg %p184
      %p191 = scmp.eq.s32.totalorder %s18, 1
      %p192 = por %p190, %p191
      %p193 = scmp.ne.s32.totalorder %s185, %s188
      %p194 = scmp.eq.s32.totalorder %s18, 0
      %p195 = por %p193, %p194
      %p196 = scmp.ne.s32.totalorder %s185, %s188
      %p197 = scmp.eq.s32.totalorder %s23, 1
      %p198 = por %p196, %p197
      %p199 = scmp.ne.s32.totalorder %s188, %s189
      %p200 = scmp.eq.s32.totalorder %s23, 0
      %p201 = por %p199, %p200
      %p202 = scmp.ne.s32.totalorder %s188, %s189
      %p203 = scmp.eq.s32.totalorder %s24, 1
      %p204 = por %p202, %p203
      %p206 = scmp.ne.s32.totalorder %s189, %s205
      %p207 = scmp.eq.s32.totalorder %s24, 0
      %p208 = por %p206, %p207
      %s209 = ssub.s32 %s18, %s25
      %p210 = scmp.eq.s32.totalorder %s209, 0
      %s212 = sadd.s32 %s211, 1
      %s213 = scalar_select %p210, %s211, %s212
      %p216 = pneg %p210
      %p217 = scmp.eq.s32.totalorder %s18, 1
      %p218 = por %p216, %p217
      %p219 = scmp.ne.s32.totalorder %s211, %s214
      %p220 = scmp.eq.s32.totalorder %s18, 0
      %p221 = por %p219, %p220
      %p222 = scmp.ne.s32.totalorder %s211, %s214
      %p223 = scmp.eq.s32.totalorder %s23, 1
      %p224 = por %p222, %p223
      %p225 = scmp.ne.s32.totalorder %s214, %s215
      %p226 = scmp.eq.s32.totalorder %s23, 0
      %p227 = por %p225, %p226
      %p228 = scmp.ne.s32.totalorder %s214, %s215
      %p229 = scmp.eq.s32.totalorder %s24, 1
      %p230 = por %p228, %p229
      %p232 = scmp.ne.s32.totalorder %s215, %s231
      %p233 = scmp.eq.s32.totalorder %s24, 0
      %p234 = por %p232, %p233
      %p235 = scmp.le.s32.totalorder 1, %s18
      %p236 = scmp.lt.s32.totalorder %s18, 3
      %p237 = pnand %p235, %p236
      %p238 = pneg %p237
      // Predicated region
      $region9: #{tpu_custom_call.1} parent=5 // pred_check
        _
      $region10: #{tpu_custom_call.1} parent=5 // pred_check_branch
        %240 = sbr.rel (%p237) target = $region12
      $region11: #{tpu_custom_call.1} parent=5 // pred_region
        %s241 = ssub.s32 %s18, 1
        // Predicated region
        $region13: #{tpu_custom_call.1} parent=11 // pred_check
          %p242 = pneg %p65
        $region14: #{tpu_custom_call.1} parent=11 // pred_check_branch
          %244 = sbr.rel (%p242) target = $region16
        $region15: #{tpu_custom_call.1} parent=11 // pred_region
          _
        $region16: #{tpu_custom_call.1} parent=11 // pred_fallthru
          _
        // Predicated region
        $region17: #{tpu_custom_call.1} parent=11 // pred_check
          %p245 = pneg %p86
        $region18: #{tpu_custom_call.1} parent=11 // pred_check_branch
          %247 = sbr.rel (%p245) target = $region20
        $region19: #{tpu_custom_call.1} parent=11 // pred_region
          _
        $region20: #{tpu_custom_call.1} parent=11 // pred_fallthru
          _
        // Predicated region
        $region21: #{tpu_custom_call.1} parent=11 // pred_check
          %p248 = pneg %p107
        $region22: #{tpu_custom_call.1} parent=11 // pred_check_branch
          %250 = sbr.rel (%p248) target = $region24
        $region23: #{tpu_custom_call.1} parent=11 // pred_region
          _
        $region24: #{tpu_custom_call.1} parent=11 // pred_fallthru
          _
        // Predicated region
        $region25: #{tpu_custom_call.1} parent=11 // pred_check
          %p251 = pneg %p128
        $region26: #{tpu_custom_call.1} parent=11 // pred_check_branch
          %253 = sbr.rel (%p251) target = $region28
        $region27: #{tpu_custom_call.1} parent=11 // pred_region
          _
        $region28: #{tpu_custom_call.1} parent=11 // pred_fallthru
          _
        // Predicated region
        $region29: #{tpu_custom_call.1} parent=11 // pred_check
          %p254 = pneg %p149
        $region30: #{tpu_custom_call.1} parent=11 // pred_check_branch
          %256 = sbr.rel (%p254) target = $region32
        $region31: #{tpu_custom_call.1} parent=11 // pred_region
          _
        $region32: #{tpu_custom_call.1} parent=11 // pred_fallthru
          _
      $region12: #{tpu_custom_call.1} parent=5 // pred_fallthru
        _
      %p257 = scmp.lt.s32.totalorder %s18, 2
      // Predicated region
      $region33: #{tpu_custom_call.1} parent=5 // pred_check
        %p258 = pneg %p257
      $region34: #{tpu_custom_call.1} parent=5 // pred_check_branch
        %260 = sbr.rel (%p258) target = $region36
      $region35: #{tpu_custom_call.1} parent=5 // pred_region
        // Predicated region
        $region37: #{tpu_custom_call.1} parent=35 // pred_check
          %p261 = pneg %p38
        $region38: #{tpu_custom_call.1} parent=35 // pred_check_branch
          %263 = sbr.rel (%p261) target = $region40
        $region39: #{tpu_custom_call.1} parent=35 // pred_region
          %s264 = sand.u32 %s28, 1
          %s265 = scalar_lea.sflag [#allocation3], %s264
          %s266 = sand.u32 %s28, 1
          %s267 = smul.addr %s266, 8
          %s268 = scalar_lea.vmem [#allocation2], %s267
          %270 = vsyncadd %s265, 0
          %s271 = smul.addr %s18, 2
          %s272 = smul.addr %s271, 4
          %s273 = scalar_lea.hbm %s0, %s272
          %s275 = sshll.u32 %s273, 4
          %s276 = int_to_ptr.hbm [resolvable:$true] %s275
          %s277 = sshll.u32 %s268, 4
          %s278 = int_to_ptr.vmem [resolvable:$true] %s277
          %280 = dma.hbm_to_vmem [thread:$0]  %s276, 128, %s278, %s265
        $region40: #{tpu_custom_call.1} parent=35 // pred_fallthru
          _
      $region36: #{tpu_custom_call.1} parent=5 // pred_fallthru
        _
      %p281 = scmp.le.s32.totalorder 1, %s18
      %p282 = scmp.lt.s32.totalorder %s18, 3
      %p283 = pnand %p281, %p282
      %p284 = pneg %p283
      // Predicated region
      $region41: #{tpu_custom_call.1} parent=5 // pred_check
        _
      $region42: #{tpu_custom_call.1} parent=5 // pred_check_branch
        %286 = sbr.rel (%p283) target = $region44
      $region43: #{tpu_custom_call.1} parent=5 // pred_region
        %s287 = ssub.s32 %s18, 1
        %s288 = sand.u32 %s31, 1
        %s289 = scalar_lea.sflag [#allocation3], %s288
        %s290 = sand.u32 %s31, 1
        %s291 = smul.addr %s290, 8
        %s292 = scalar_lea.vmem [#allocation2], %s291
        // Predicated region
        $region45: #{tpu_custom_call.1} parent=43 // pred_check
          %p293 = pneg %p44
        $region46: #{tpu_custom_call.1} parent=43 // pred_check_branch
          %295 = sbr.rel (%p293) target = $region48
        $region47: #{tpu_custom_call.1} parent=43 // pred_region
          %297 = dma.done %s289, 128
        $region48: #{tpu_custom_call.1} parent=43 // pred_fallthru
          _
        %s298 = sand.u32 %s31, 1
        %s299 = scalar_lea.sflag [#allocation3], %s298
        %s300 = sand.u32 %s31, 1
        %s301 = smul.addr %s300, 8
        %s302 = scalar_lea.vmem [#allocation2], %s301
        %p303 = pneg %p44
        %p304 = pneg %p41
        %p305 = pneg %p65
        %p306 = pneg %p62
        %p307 = pneg %p86
        %p308 = pneg %p83
        %p309 = pneg %p107
        %p310 = pneg %p104
        %p311 = pneg %p128
        %p312 = pneg %p125
        %p313 = pneg %p149
        %p314 = pneg %p146
        %p315 = pneg %p175
        %p316 = pneg %p172
        %p317 = scmp.lt.s32.totalorder %s23, 1
        %s318 = scalar_select %p317, %s23, 1
        %s319 = smul.addr %s318, 32
        %s320 = smul.addr %s319, 8
        %s321 = scalar_lea.vmem %s6, %s320
        %p322 = pneg %p201
        %p323 = pneg %p198
        %p324 = scmp.lt.s32.totalorder %s23, 1
        %s325 = scalar_select %p324, %s23, 1
        %s326 = smul.addr %s325, 32
        %s327 = smul.addr %s326, 8
        %s328 = scalar_lea.vmem %s7, %s327
        %p329 = pneg %p227
        %p330 = pneg %p224
        %p331 = scmp.lt.s32.totalorder %s23, 1
        %s332 = scalar_select %p331, %s23, 1
        %s333 = smul.addr %s332, 32
        %s334 = smul.addr %s333, 8
        %s335 = scalar_lea.vmem %s8, %s334
        %p336 = scmp.lt.s32.totalorder %s23, 1
        %s337 = scalar_select %p336, %s23, 1
        %s338 = smul.addr %s337, 32
        %s339 = smul.addr %s338, 8
        %s340 = scalar_lea.vmem %s6, %s339
        %p341 = scmp.lt.s32.totalorder %s23, 1
        %s342 = scalar_select %p341, %s23, 1
        %s343 = smul.addr %s342, 32
        %s344 = smul.addr %s343, 8
        %s345 = scalar_lea.vmem %s7, %s344
        %p346 = scmp.lt.s32.totalorder %s23, 1
        %s347 = scalar_select %p346, %s23, 1
        %s348 = smul.addr %s347, 32
        %s349 = smul.addr %s348, 8
        %s350 = scalar_lea.vmem %s8, %s349
        %v351 = vld [vmem:[%s292] sm:$0xff]
        %353 = vst [vmem:[#allocation1] ss:$2 sm:$0xff] %v351
        %v354 = vld.sshfl [vmem:[#allocation1] sm:$0xff pattern:$0x75316420]
        %v355 = vld.sshfl [vmem:[#allocation1 + $0x8] sm:$0xff pattern:$0x75316420]
        %vm358 = vcmask 1043456
        %v359 = vsel %vm358, %v354, 0.0
        %v360 = vsel %vm358, %v355, 0.0
        %v361 = vadd.f32 %v359, %v360
        %362 = vadd.xlane.f32.xlu0 %v361
        %v363 = vpop.xlane.xlu0 %362
        %v364 = vmul.f32 %v351, %v351
        %366 = vst [vmem:[#allocation1] ss:$2 sm:$0xff] %v364
        %v367 = vld.sshfl [vmem:[#allocation1] sm:$0xff pattern:$0x75316420]
        %v368 = vld.sshfl [vmem:[#allocation1 + $0x8] sm:$0xff pattern:$0x75316420]
        %v371 = vsel %vm358, %v367, 0.0
        %v372 = vsel %vm358, %v368, 0.0
        %v373 = vadd.f32 %v371, %v372
        %374 = vadd.xlane.f32.xlu0 %v373
        %v375 = vpop.xlane.xlu0 %374
        %vm376 = vcmask 7168
        %v377 = vsel %vm376, %v363, %v375
        %v378 = vld [vmem:[%s3] sm:$0xf]
        %vm379 = vcmask 31744
        %v381 = vsel %vm379, %v378, 0
        %v384 = vsel %vm358, %v377, 0
        %386 = vmatpush.msra.mxu0 0.0
        %387 = vmatpush.msra.mxu0 0.0
        %388 = vmatpush.msra.mxu0 0.0
        %389 = vmatpush.msra.mxu0 0.0
        %390 = vmatpush.msra.mxu0 0.0
        %391 = vmatpush.msra.mxu0 0.0
        %392 = vmatpush.msra.mxu0 0.0
        %393 = vmatpush.msra.mxu0 0.0
        %394 = vmatpush.msra.mxu0 0.0
        %395 = vmatpush.msra.mxu0 0.0
        %396 = vmatpush.msra.mxu0 0.0
        %397 = vmatpush.msra.mxu0 0.0
        %398 = vmatpush.msra.mxu0 0.0
        %399 = vmatpush.msra.mxu0 0.0
        %400 = vmatpush.msra.mxu0 0.0
        %401 = vmatpush.msra.mxu0 %v384
        %402 = vmatmul.f32.gmra.mxu0 %v381
        %v403 = vpop.f32.mrf.mxu0
        %v404 = vadd.f32 0.0, %v403
        %405 = vdwg.mxu0
        %v406 = vmul.f32 %v404, %v404
        %408 = vrot.lane.b32.xlu0 %v406, 1
        %v409 = vpop.permute.xlu0 %408
        %v411 = vsub.f32 %v404, %v409
        %v412 = vadd.f32 %v411, 1e-05
        %v413 = vrsqrt.pop %v412
        %v414 = vmul.f32 %v413, %v412
        %v415 = vmul.f32 %v414, %v413
        %v416 = vmul.f32 0.5, %v415
        %v417 = vsub.f32 1.5, %v416
        %v418 = vmul.f32 %v413, %v417
        %vm419 = vweird.f32 %v412
        %vm420 = vweird.f32 %v413
        %vm421 = vmor %vm419, %vm420
        %v422 = vsel %vm421, %v413, %v418
        %424 = vset.pattern.permute.xlu0 0
        %425 = vperm.xlu0 %424, %v404
        %v426 = vpop.permute.xlu0 %425
        %v428 = vunpack.c.l.s4 839922192
        %v429 = vunpack.c.0.s8 %v428
        %v430 = vperm.slane %v426, %v429
        %v432 = vsub.f32 %v351, %v430
        %434 = vset.pattern.permute.xlu0 1
        %435 = vperm.xlu0 %434, %v422
        %v436 = vpop.permute.xlu0 %435
        %v438 = vunpack.c.l.s4 839922192
        %v439 = vunpack.c.0.s8 %v438
        %v440 = vperm.slane %v436, %v439
        %v442 = vmul.f32 %v432, %v440
        %v443 = vld [vmem:[%s1] sm:$0xf]
        %445 = vset.pattern.permute.xlu0 0
        %446 = vperm.xlu0 %445, %v443
        %v447 = vpop.permute.xlu0 %446
        %v449 = vunpack.c.l.s4 839922192
        %v450 = vunpack.c.0.s8 %v449
        %v451 = vperm.slane %v447, %v450
        %v453 = vmul.f32 %v442, %v451
        %v454 = vld [vmem:[%s2] sm:$0xf]
        %456 = vset.pattern.permute.xlu0 0
        %457 = vperm.xlu0 %456, %v454
        %v458 = vpop.permute.xlu0 %457
        %v460 = vunpack.c.l.s4 839922192
        %v461 = vunpack.c.0.s8 %v460
        %v462 = vperm.slane %v458, %v461
        %v464 = vadd.f32 %v453, %v462
        %v465 = vld [vmem:[%s4] sm:$0xf]
        %v466 = vld [vmem:[%s5] sm:$0x1]
        %v468 = vperm.slane %v466, 0
        %471 = vst [vmem:[#allocation1] ss:$2 sm:$0xff] %v464
        %v472 = vld.sshfl [vmem:[#allocation1] sm:$0xff pattern:$0x75316420]
        %v473 = vld.sshfl [vmem:[#allocation1 + $0x8] sm:$0xff pattern:$0x75316420]
        %476 = vxpose.xlu0.b32.start [1/16] %v472, 128
        %477 = vxpose.xlu0.b32.cont [2/16] 0.0, 128
        %478 = vxpose.xlu0.b32.cont [3/16] 0.0, 128
        %479 = vxpose.xlu0.b32.cont [4/16] 0.0, 128
        %480 = vxpose.xlu0.b32.cont [5/16] 0.0, 128
        %481 = vxpose.xlu0.b32.cont [6/16] 0.0, 128
        %482 = vxpose.xlu0.b32.cont [7/16] 0.0, 128
        %483 = vxpose.xlu0.b32.cont [8/16] 0.0, 128
        %484 = vxpose.xlu0.b32.cont [9/16] 0.0, 128
        %485 = vxpose.xlu0.b32.cont [10/16] 0.0, 128
        %486 = vxpose.xlu0.b32.cont [11/16] 0.0, 128
        %487 = vxpose.xlu0.b32.cont [12/16] 0.0, 128
        %488 = vxpose.xlu0.b32.cont [13/16] 0.0, 128
        %489 = vxpose.xlu0.b32.cont [14/16] 0.0, 128
        %490 = vxpose.xlu0.b32.cont [15/16] 0.0, 128
        %491 = vxpose.xlu0.b32.end [16/16] 0.0, 128
        %v492 = vpop.trf.xlu0
        %v493 = vpop.trf.xlu0
        %v494 = vpop.trf.xlu0
        %v495 = vpop.trf.xlu0
        %v496 = vpop.trf.xlu0
        %v497 = vpop.trf.xlu0
        %v498 = vpop.trf.xlu0
        %v499 = vpop.trf.xlu0
        %v500 = vpop.trf.xlu0
        %v501 = vpop.trf.xlu0
        %v502 = vpop.trf.xlu0
        %v503 = vpop.trf.xlu0
        %v504 = vpop.trf.xlu0
        %v505 = vpop.trf.xlu0
        %v506 = vpop.trf.xlu0
        %v507 = vpop.trf.xlu0
        %508 = vxpose.xlu0.b32.start [1/16] %v473, 128
        %509 = vxpose.xlu0.b32.cont [2/16] 0.0, 128
        %510 = vxpose.xlu0.b32.cont [3/16] 0.0, 128
        %511 = vxpose.xlu0.b32.cont [4/16] 0.0, 128
        %512 = vxpose.xlu0.b32.cont [5/16] 0.0, 128
        %513 = vxpose.xlu0.b32.cont [6/16] 0.0, 128
        %514 = vxpose.xlu0.b32.cont [7/16] 0.0, 128
        %515 = vxpose.xlu0.b32.cont [8/16] 0.0, 128
        %516 = vxpose.xlu0.b32.cont [9/16] 0.0, 128
        %517 = vxpose.xlu0.b32.cont [10/16] 0.0, 128
        %518 = vxpose.xlu0.b32.cont [11/16] 0.0, 128
        %519 = vxpose.xlu0.b32.cont [12/16] 0.0, 128
        %520 = vxpose.xlu0.b32.cont [13/16] 0.0, 128
        %521 = vxpose.xlu0.b32.cont [14/16] 0.0, 128
        %522 = vxpose.xlu0.b32.cont [15/16] 0.0, 128
        %523 = vxpose.xlu0.b32.end [16/16] 0.0, 128
        %v524 = vpop.trf.xlu0
        %v525 = vpop.trf.xlu0
        %v526 = vpop.trf.xlu0
        %v527 = vpop.trf.xlu0
        %v528 = vpop.trf.xlu0
        %v529 = vpop.trf.xlu0
        %v530 = vpop.trf.xlu0
        %v531 = vpop.trf.xlu0
        %v532 = vpop.trf.xlu0
        %v533 = vpop.trf.xlu0
        %v534 = vpop.trf.xlu0
        %v535 = vpop.trf.xlu0
        %v536 = vpop.trf.xlu0
        %v537 = vpop.trf.xlu0
        %v538 = vpop.trf.xlu0
        %v539 = vpop.trf.xlu0
        %v541 = vsel %vm379, %v492, 0
        %v544 = vsel %vm379, %v493, 0
        %v547 = vsel %vm379, %v494, 0
        %v550 = vsel %vm379, %v495, 0
        %v553 = vsel %vm379, %v496, 0
        %v556 = vsel %vm379, %v497, 0
        %v559 = vsel %vm379, %v498, 0
        %v562 = vsel %vm379, %v499, 0
        %v565 = vsel %vm379, %v500, 0
        %v568 = vsel %vm379, %v501, 0
        %v571 = vsel %vm379, %v502, 0
        %v574 = vsel %vm379, %v503, 0
        %v577 = vsel %vm379, %v504, 0
        %v580 = vsel %vm379, %v505, 0
        %v583 = vsel %vm379, %v506, 0
        %v586 = vsel %vm379, %v507, 0
        %v589 = vsel %vm379, %v524, 0
        %v592 = vsel %vm379, %v525, 0
        %v595 = vsel %vm379, %v526, 0
        %v598 = vsel %vm379, %v527, 0
        %v601 = vsel %vm379, %v528, 0
        %v604 = vsel %vm379, %v529, 0
        %v607 = vsel %vm379, %v530, 0
        %v610 = vsel %vm379, %v531, 0
        %v613 = vsel %vm379, %v532, 0
        %v616 = vsel %vm379, %v533, 0
        %v619 = vsel %vm379, %v534, 0
        %v622 = vsel %vm379, %v535, 0
        %v625 = vsel %vm379, %v536, 0
        %v628 = vsel %vm379, %v537, 0
        %v631 = vsel %vm379, %v538, 0
        %v634 = vsel %vm379, %v539, 0
        %v637 = vsel %vm358, %v465, 0
        %639 = vmatpush.msra.mxu0 0.0
        %640 = vmatpush.msra.mxu0 0.0
        %641 = vmatpush.msra.mxu0 0.0
        %642 = vmatpush.msra.mxu0 0.0
        %643 = vmatpush.msra.mxu0 0.0
        %644 = vmatpush.msra.mxu0 0.0
        %645 = vmatpush.msra.mxu0 0.0
        %646 = vmatpush.msra.mxu0 0.0
        %647 = vmatpush.msra.mxu0 0.0
        %648 = vmatpush.msra.mxu0 0.0
        %649 = vmatpush.msra.mxu0 0.0
        %650 = vmatpush.msra.mxu0 0.0
        %651 = vmatpush.msra.mxu0 0.0
        %652 = vmatpush.msra.mxu0 0.0
        %653 = vmatpush.msra.mxu0 0.0
        %654 = vmatpush.msra.mxu0 %v637
        %655 = vmatmul.f32.gmra.mxu0 %v541
        %v656 = vpop.f32.mrf.mxu0
        %v657 = vadd.f32 %v468, %v656
        %658 = vmatmul.f32.gmra.mxu0 %v544
        %v659 = vpop.f32.mrf.mxu0
        %v660 = vadd.f32 %v468, %v659
        %661 = vmatmul.f32.gmra.mxu0 %v547
        %v662 = vpop.f32.mrf.mxu0
        %v663 = vadd.f32 %v468, %v662
        %664 = vmatmul.f32.gmra.mxu0 %v550
        %v665 = vpop.f32.mrf.mxu0
        %v666 = vadd.f32 %v468, %v665
        %667 = vmatmul.f32.gmra.mxu0 %v553
        %v668 = vpop.f32.mrf.mxu0
        %v669 = vadd.f32 %v468, %v668
        %670 = vmatmul.f32.gmra.mxu0 %v556
        %v671 = vpop.f32.mrf.mxu0
        %v672 = vadd.f32 %v468, %v671
        %673 = vmatmul.f32.gmra.mxu0 %v559
        %v674 = vpop.f32.mrf.mxu0
        %v675 = vadd.f32 %v468, %v674
        %676 = vmatmul.f32.gmra.mxu0 %v562
        %v677 = vpop.f32.mrf.mxu0
        %v678 = vadd.f32 %v468, %v677
        %679 = vmatmul.f32.gmra.mxu0 %v565
        %v680 = vpop.f32.mrf.mxu0
        %v681 = vadd.f32 %v468, %v680
        %682 = vmatmul.f32.gmra.mxu0 %v568
        %v683 = vpop.f32.mrf.mxu0
        %v684 = vadd.f32 %v468, %v683
        %685 = vmatmul.f32.gmra.mxu0 %v571
        %v686 = vpop.f32.mrf.mxu0
        %v687 = vadd.f32 %v468, %v686
        %688 = vmatmul.f32.gmra.mxu0 %v574
        %v689 = vpop.f32.mrf.mxu0
        %v690 = vadd.f32 %v468, %v689
        %691 = vmatmul.f32.gmra.mxu0 %v577
        %v692 = vpop.f32.mrf.mxu0
        %v693 = vadd.f32 %v468, %v692
        %694 = vmatmul.f32.gmra.mxu0 %v580
        %v695 = vpop.f32.mrf.mxu0
        %v696 = vadd.f32 %v468, %v695
        %697 = vmatmul.f32.gmra.mxu0 %v583
        %v698 = vpop.f32.mrf.mxu0
        %v699 = vadd.f32 %v468, %v698
        %700 = vmatmul.f32.gmra.mxu0 %v586
        %v701 = vpop.f32.mrf.mxu0
        %v702 = vadd.f32 %v468, %v701
        %703 = vmatmul.f32.gmra.mxu0 %v589
        %v704 = vpop.f32.mrf.mxu0
        %v705 = vadd.f32 %v468, %v704
        %706 = vmatmul.f32.gmra.mxu0 %v592
        %v707 = vpop.f32.mrf.mxu0
        %v708 = vadd.f32 %v468, %v707
        %709 = vmatmul.f32.gmra.mxu0 %v595
        %v710 = vpop.f32.mrf.mxu0
        %v711 = vadd.f32 %v468, %v710
        %712 = vmatmul.f32.gmra.mxu0 %v598
        %v713 = vpop.f32.mrf.mxu0
        %v714 = vadd.f32 %v468, %v713
        %715 = vmatmul.f32.gmra.mxu0 %v601
        %v716 = vpop.f32.mrf.mxu0
        %v717 = vadd.f32 %v468, %v716
        %718 = vmatmul.f32.gmra.mxu0 %v604
        %v719 = vpop.f32.mrf.mxu0
        %v720 = vadd.f32 %v468, %v719
        %721 = vmatmul.f32.gmra.mxu0 %v607
        %v722 = vpop.f32.mrf.mxu0
        %v723 = vadd.f32 %v468, %v722
        %724 = vmatmul.f32.gmra.mxu0 %v610
        %v725 = vpop.f32.mrf.mxu0
        %v726 = vadd.f32 %v468, %v725
        %727 = vmatmul.f32.gmra.mxu0 %v613
        %v728 = vpop.f32.mrf.mxu0
        %v729 = vadd.f32 %v468, %v728
        %730 = vmatmul.f32.gmra.mxu0 %v616
        %v731 = vpop.f32.mrf.mxu0
        %v732 = vadd.f32 %v468, %v731
        %733 = vmatmul.f32.gmra.mxu0 %v619
        %v734 = vpop.f32.mrf.mxu0
        %v735 = vadd.f32 %v468, %v734
        %736 = vmatmul.f32.gmra.mxu0 %v622
        %v737 = vpop.f32.mrf.mxu0
        %v738 = vadd.f32 %v468, %v737
        %739 = vmatmul.f32.gmra.mxu0 %v625
        %v740 = vpop.f32.mrf.mxu0
        %v741 = vadd.f32 %v468, %v740
        %742 = vmatmul.f32.gmra.mxu0 %v628
        %v743 = vpop.f32.mrf.mxu0
        %v744 = vadd.f32 %v468, %v743
        %745 = vmatmul.f32.gmra.mxu0 %v631
        %v746 = vpop.f32.mrf.mxu0
        %v747 = vadd.f32 %v468, %v746
        %748 = vmatmul.f32.gmra.mxu0 %v634
        %v749 = vpop.f32.mrf.mxu0
        %v750 = vadd.f32 %v468, %v749
        %751 = vdwg.mxu0
        %752 = vst.msk [vmem:[%s340] sm:$0xff] %vm379, %v657
        %753 = vst.msk [vmem:[%s340 + $0x8] sm:$0xff] %vm379, %v660
        %754 = vst.msk [vmem:[%s340 + $0x10] sm:$0xff] %vm379, %v663
        %755 = vst.msk [vmem:[%s340 + $0x18] sm:$0xff] %vm379, %v666
        %756 = vst.msk [vmem:[%s340 + $0x20] sm:$0xff] %vm379, %v669
        %757 = vst.msk [vmem:[%s340 + $0x28] sm:$0xff] %vm379, %v672
        %758 = vst.msk [vmem:[%s340 + $0x30] sm:$0xff] %vm379, %v675
        %759 = vst.msk [vmem:[%s340 + $0x38] sm:$0xff] %vm379, %v678
        %760 = vst.msk [vmem:[%s340 + $0x40] sm:$0xff] %vm379, %v681
        %761 = vst.msk [vmem:[%s340 + $0x48] sm:$0xff] %vm379, %v684
        %762 = vst.msk [vmem:[%s340 + $0x50] sm:$0xff] %vm379, %v687
        %763 = vst.msk [vmem:[%s340 + $0x58] sm:$0xff] %vm379, %v690
        %764 = vst.msk [vmem:[%s340 + $0x60] sm:$0xff] %vm379, %v693
        %765 = vst.msk [vmem:[%s340 + $0x68] sm:$0xff] %vm379, %v696
        %766 = vst.msk [vmem:[%s340 + $0x70] sm:$0xff] %vm379, %v699
        %767 = vst.msk [vmem:[%s340 + $0x78] sm:$0xff] %vm379, %v702
        %768 = vst.msk [vmem:[%s340 + $0x80] sm:$0xff] %vm379, %v705
        %769 = vst.msk [vmem:[%s340 + $0x88] sm:$0xff] %vm379, %v708
        %770 = vst.msk [vmem:[%s340 + $0x90] sm:$0xff] %vm379, %v711
        %771 = vst.msk [vmem:[%s340 + $0x98] sm:$0xff] %vm379, %v714
        %772 = vst.msk [vmem:[%s340 + $0xa0] sm:$0xff] %vm379, %v717
        %773 = vst.msk [vmem:[%s340 + $0xa8] sm:$0xff] %vm379, %v720
        %774 = vst.msk [vmem:[%s340 + $0xb0] sm:$0xff] %vm379, %v723
        %775 = vst.msk [vmem:[%s340 + $0xb8] sm:$0xff] %vm379, %v726
        %776 = vst.msk [vmem:[%s340 + $0xc0] sm:$0xff] %vm379, %v729
        %777 = vst.msk [vmem:[%s340 + $0xc8] sm:$0xff] %vm379, %v732
        %778 = vst.msk [vmem:[%s340 + $0xd0] sm:$0xff] %vm379, %v735
        %779 = vst.msk [vmem:[%s340 + $0xd8] sm:$0xff] %vm379, %v738
        %780 = vst.msk [vmem:[%s340 + $0xe0] sm:$0xff] %vm379, %v741
        %781 = vst.msk [vmem:[%s340 + $0xe8] sm:$0xff] %vm379, %v744
        %782 = vst.msk [vmem:[%s340 + $0xf0] sm:$0xff] %vm379, %v747
        %783 = vst.msk [vmem:[%s340 + $0xf8] sm:$0xff] %vm379, %v750
        %816 = vrot.lane.b32.xlu0 %v657, 124
        %v817 = vpop.permute.xlu0 %816
        %818 = vrot.lane.b32.xlu0 %v660, 124
        %v819 = vpop.permute.xlu0 %818
        %820 = vrot.lane.b32.xlu0 %v663, 124
        %v821 = vpop.permute.xlu0 %820
        %822 = vrot.lane.b32.xlu0 %v666, 124
        %v823 = vpop.permute.xlu0 %822
        %824 = vrot.lane.b32.xlu0 %v669, 124
        %v825 = vpop.permute.xlu0 %824
        %826 = vrot.lane.b32.xlu0 %v672, 124
        %v827 = vpop.permute.xlu0 %826
        %828 = vrot.lane.b32.xlu0 %v675, 124
        %v829 = vpop.permute.xlu0 %828
        %830 = vrot.lane.b32.xlu0 %v678, 124
        %v831 = vpop.permute.xlu0 %830
        %832 = vrot.lane.b32.xlu0 %v681, 124
        %v833 = vpop.permute.xlu0 %832
        %834 = vrot.lane.b32.xlu0 %v684, 124
        %v835 = vpop.permute.xlu0 %834
        %836 = vrot.lane.b32.xlu0 %v687, 124
        %v837 = vpop.permute.xlu0 %836
        %838 = vrot.lane.b32.xlu0 %v690, 124
        %v839 = vpop.permute.xlu0 %838
        %840 = vrot.lane.b32.xlu0 %v693, 124
        %v841 = vpop.permute.xlu0 %840
        %842 = vrot.lane.b32.xlu0 %v696, 124
        %v843 = vpop.permute.xlu0 %842
        %844 = vrot.lane.b32.xlu0 %v699, 124
        %v845 = vpop.permute.xlu0 %844
        %846 = vrot.lane.b32.xlu0 %v702, 124
        %v847 = vpop.permute.xlu0 %846
        %848 = vrot.lane.b32.xlu0 %v705, 124
        %v849 = vpop.permute.xlu0 %848
        %850 = vrot.lane.b32.xlu0 %v708, 124
        %v851 = vpop.permute.xlu0 %850
        %852 = vrot.lane.b32.xlu0 %v711, 124
        %v853 = vpop.permute.xlu0 %852
        %854 = vrot.lane.b32.xlu0 %v714, 124
        %v855 = vpop.permute.xlu0 %854
        %856 = vrot.lane.b32.xlu0 %v717, 124
        %v857 = vpop.permute.xlu0 %856
        %858 = vrot.lane.b32.xlu0 %v720, 124
        %v859 = vpop.permute.xlu0 %858
        %860 = vrot.lane.b32.xlu0 %v723, 124
        %v861 = vpop.permute.xlu0 %860
        %862 = vrot.lane.b32.xlu0 %v726, 124
        %v863 = vpop.permute.xlu0 %862
        %864 = vrot.lane.b32.xlu0 %v729, 124
        %v865 = vpop.permute.xlu0 %864
        %866 = vrot.lane.b32.xlu0 %v732, 124
        %v867 = vpop.permute.xlu0 %866
        %868 = vrot.lane.b32.xlu0 %v735, 124
        %v869 = vpop.permute.xlu0 %868
        %870 = vrot.lane.b32.xlu0 %v738, 124
        %v871 = vpop.permute.xlu0 %870
        %872 = vrot.lane.b32.xlu0 %v741, 124
        %v873 = vpop.permute.xlu0 %872
        %874 = vrot.lane.b32.xlu0 %v744, 124
        %v875 = vpop.permute.xlu0 %874
        %876 = vrot.lane.b32.xlu0 %v747, 124
        %v877 = vpop.permute.xlu0 %876
        %878 = vrot.lane.b32.xlu0 %v750, 124
        %v879 = vpop.permute.xlu0 %878
        %912 = vst.msk [vmem:[%s345] sm:$0xff] %vm379, %v817
        %913 = vst.msk [vmem:[%s345 + $0x8] sm:$0xff] %vm379, %v819
        %914 = vst.msk [vmem:[%s345 + $0x10] sm:$0xff] %vm379, %v821
        %915 = vst.msk [vmem:[%s345 + $0x18] sm:$0xff] %vm379, %v823
        %916 = vst.msk [vmem:[%s345 + $0x20] sm:$0xff] %vm379, %v825
        %917 = vst.msk [vmem:[%s345 + $0x28] sm:$0xff] %vm379, %v827
        %918 = vst.msk [vmem:[%s345 + $0x30] sm:$0xff] %vm379, %v829
        %919 = vst.msk [vmem:[%s345 + $0x38] sm:$0xff] %vm379, %v831
        %920 = vst.msk [vmem:[%s345 + $0x40] sm:$0xff] %vm379, %v833
        %921 = vst.msk [vmem:[%s345 + $0x48] sm:$0xff] %vm379, %v835
        %922 = vst.msk [vmem:[%s345 + $0x50] sm:$0xff] %vm379, %v837
        %923 = vst.msk [vmem:[%s345 + $0x58] sm:$0xff] %vm379, %v839
        %924 = vst.msk [vmem:[%s345 + $0x60] sm:$0xff] %vm379, %v841
        %925 = vst.msk [vmem:[%s345 + $0x68] sm:$0xff] %vm379, %v843
        %926 = vst.msk [vmem:[%s345 + $0x70] sm:$0xff] %vm379, %v845
        %927 = vst.msk [vmem:[%s345 + $0x78] sm:$0xff] %vm379, %v847
        %928 = vst.msk [vmem:[%s345 + $0x80] sm:$0xff] %vm379, %v849
        %929 = vst.msk [vmem:[%s345 + $0x88] sm:$0xff] %vm379, %v851
        %930 = vst.msk [vmem:[%s345 + $0x90] sm:$0xff] %vm379, %v853
        %931 = vst.msk [vmem:[%s345 + $0x98] sm:$0xff] %vm379, %v855
        %932 = vst.msk [vmem:[%s345 + $0xa0] sm:$0xff] %vm379, %v857
        %933 = vst.msk [vmem:[%s345 + $0xa8] sm:$0xff] %vm379, %v859
        %934 = vst.msk [vmem:[%s345 + $0xb0] sm:$0xff] %vm379, %v861
        %935 = vst.msk [vmem:[%s345 + $0xb8] sm:$0xff] %vm379, %v863
        %936 = vst.msk [vmem:[%s345 + $0xc0] sm:$0xff] %vm379, %v865
        %937 = vst.msk [vmem:[%s345 + $0xc8] sm:$0xff] %vm379, %v867
        %938 = vst.msk [vmem:[%s345 + $0xd0] sm:$0xff] %vm379, %v869
        %939 = vst.msk [vmem:[%s345 + $0xd8] sm:$0xff] %vm379, %v871
        %940 = vst.msk [vmem:[%s345 + $0xe0] sm:$0xff] %vm379, %v873
        %941 = vst.msk [vmem:[%s345 + $0xe8] sm:$0xff] %vm379, %v875
        %942 = vst.msk [vmem:[%s345 + $0xf0] sm:$0xff] %vm379, %v877
        %943 = vst.msk [vmem:[%s345 + $0xf8] sm:$0xff] %vm379, %v879
        %944 = vrot.lane.b32.xlu0 %v657, 120
        %v945 = vpop.permute.xlu0 %944
        %946 = vrot.lane.b32.xlu0 %v660, 120
        %v947 = vpop.permute.xlu0 %946
        %948 = vrot.lane.b32.xlu0 %v663, 120
        %v949 = vpop.permute.xlu0 %948
        %950 = vrot.lane.b32.xlu0 %v666, 120
        %v951 = vpop.permute.xlu0 %950
        %952 = vrot.lane.b32.xlu0 %v669, 120
        %v953 = vpop.permute.xlu0 %952
        %954 = vrot.lane.b32.xlu0 %v672, 120
        %v955 = vpop.permute.xlu0 %954
        %956 = vrot.lane.b32.xlu0 %v675, 120
        %v957 = vpop.permute.xlu0 %956
        %958 = vrot.lane.b32.xlu0 %v678, 120
        %v959 = vpop.permute.xlu0 %958
        %960 = vrot.lane.b32.xlu0 %v681, 120
        %v961 = vpop.permute.xlu0 %960
        %962 = vrot.lane.b32.xlu0 %v684, 120
        %v963 = vpop.permute.xlu0 %962
        %964 = vrot.lane.b32.xlu0 %v687, 120
        %v965 = vpop.permute.xlu0 %964
        %966 = vrot.lane.b32.xlu0 %v690, 120
        %v967 = vpop.permute.xlu0 %966
        %968 = vrot.lane.b32.xlu0 %v693, 120
        %v969 = vpop.permute.xlu0 %968
        %970 = vrot.lane.b32.xlu0 %v696, 120
        %v971 = vpop.permute.xlu0 %970
        %972 = vrot.lane.b32.xlu0 %v699, 120
        %v973 = vpop.permute.xlu0 %972
        %974 = vrot.lane.b32.xlu0 %v702, 120
        %v975 = vpop.permute.xlu0 %974
        %976 = vrot.lane.b32.xlu0 %v705, 120
        %v977 = vpop.permute.xlu0 %976
        %978 = vrot.lane.b32.xlu0 %v708, 120
        %v979 = vpop.permute.xlu0 %978
        %980 = vrot.lane.b32.xlu0 %v711, 120
        %v981 = vpop.permute.xlu0 %980
        %982 = vrot.lane.b32.xlu0 %v714, 120
        %v983 = vpop.permute.xlu0 %982
        %984 = vrot.lane.b32.xlu0 %v717, 120
        %v985 = vpop.permute.xlu0 %984
        %986 = vrot.lane.b32.xlu0 %v720, 120
        %v987 = vpop.permute.xlu0 %986
        %988 = vrot.lane.b32.xlu0 %v723, 120
        %v989 = vpop.permute.xlu0 %988
        %990 = vrot.lane.b32.xlu0 %v726, 120
        %v991 = vpop.permute.xlu0 %990
        %992 = vrot.lane.b32.xlu0 %v729, 120
        %v993 = vpop.permute.xlu0 %992
        %994 = vrot.lane.b32.xlu0 %v732, 120
        %v995 = vpop.permute.xlu0 %994
        %996 = vrot.lane.b32.xlu0 %v735, 120
        %v997 = vpop.permute.xlu0 %996
        %998 = vrot.lane.b32.xlu0 %v738, 120
        %v999 = vpop.permute.xlu0 %998
        %1000 = vrot.lane.b32.xlu0 %v741, 120
        %v1001 = vpop.permute.xlu0 %1000
        %1002 = vrot.lane.b32.xlu0 %v744, 120
        %v1003 = vpop.permute.xlu0 %1002
        %1004 = vrot.lane.b32.xlu0 %v747, 120
        %v1005 = vpop.permute.xlu0 %1004
        %1006 = vrot.lane.b32.xlu0 %v750, 120
        %v1007 = vpop.permute.xlu0 %1006
        %1040 = vst.msk [vmem:[%s350] sm:$0xff] %vm379, %v945
        %1041 = vst.msk [vmem:[%s350 + $0x8] sm:$0xff] %vm379, %v947
        %1042 = vst.msk [vmem:[%s350 + $0x10] sm:$0xff] %vm379, %v949
        %1043 = vst.msk [vmem:[%s350 + $0x18] sm:$0xff] %vm379, %v951
        %1044 = vst.msk [vmem:[%s350 + $0x20] sm:$0xff] %vm379, %v953
        %1045 = vst.msk [vmem:[%s350 + $0x28] sm:$0xff] %vm379, %v955
        %1046 = vst.msk [vmem:[%s350 + $0x30] sm:$0xff] %vm379, %v957
        %1047 = vst.msk [vmem:[%s350 + $0x38] sm:$0xff] %vm379, %v959
        %1048 = vst.msk [vmem:[%s350 + $0x40] sm:$0xff] %vm379, %v961
        %1049 = vst.msk [vmem:[%s350 + $0x48] sm:$0xff] %vm379, %v963
        %1050 = vst.msk [vmem:[%s350 + $0x50] sm:$0xff] %vm379, %v965
        %1051 = vst.msk [vmem:[%s350 + $0x58] sm:$0xff] %vm379, %v967
        %1052 = vst.msk [vmem:[%s350 + $0x60] sm:$0xff] %vm379, %v969
        %1053 = vst.msk [vmem:[%s350 + $0x68] sm:$0xff] %vm379, %v971
        %1054 = vst.msk [vmem:[%s350 + $0x70] sm:$0xff] %vm379, %v973
        %1055 = vst.msk [vmem:[%s350 + $0x78] sm:$0xff] %vm379, %v975
        %1056 = vst.msk [vmem:[%s350 + $0x80] sm:$0xff] %vm379, %v977
        %1057 = vst.msk [vmem:[%s350 + $0x88] sm:$0xff] %vm379, %v979
        %1058 = vst.msk [vmem:[%s350 + $0x90] sm:$0xff] %vm379, %v981
        %1059 = vst.msk [vmem:[%s350 + $0x98] sm:$0xff] %vm379, %v983
        %1060 = vst.msk [vmem:[%s350 + $0xa0] sm:$0xff] %vm379, %v985
        %1061 = vst.msk [vmem:[%s350 + $0xa8] sm:$0xff] %vm379, %v987
        %1062 = vst.msk [vmem:[%s350 + $0xb0] sm:$0xff] %vm379, %v989
        %1063 = vst.msk [vmem:[%s350 + $0xb8] sm:$0xff] %vm379, %v991
        %1064 = vst.msk [vmem:[%s350 + $0xc0] sm:$0xff] %vm379, %v993
        %1065 = vst.msk [vmem:[%s350 + $0xc8] sm:$0xff] %vm379, %v995
        %1066 = vst.msk [vmem:[%s350 + $0xd0] sm:$0xff] %vm379, %v997
        %1067 = vst.msk [vmem:[%s350 + $0xd8] sm:$0xff] %vm379, %v999
        %1068 = vst.msk [vmem:[%s350 + $0xe0] sm:$0xff] %vm379, %v1001
        %1069 = vst.msk [vmem:[%s350 + $0xe8] sm:$0xff] %vm379, %v1003
        %1070 = vst.msk [vmem:[%s350 + $0xf0] sm:$0xff] %vm379, %v1005
        %1071 = vst.msk [vmem:[%s350 + $0xf8] sm:$0xff] %vm379, %v1007
        %p1072 = scmp.lt.s32.totalorder %s23, 1
        %s1073 = scalar_select %p1072, %s23, 1
        %s1074 = smul.addr %s1073, 32
        %s1075 = smul.addr %s1074, 8
        %s1076 = scalar_lea.vmem %s6, %s1075
        %p1077 = scmp.lt.s32.totalorder %s23, 1
        %s1078 = scalar_select %p1077, %s23, 1
        %s1079 = smul.addr %s1078, 32
        %s1080 = smul.addr %s1079, 8
        %s1081 = scalar_lea.vmem %s7, %s1080
        %p1082 = scmp.lt.s32.totalorder %s23, 1
        %s1083 = scalar_select %p1082, %s23, 1
        %s1084 = smul.addr %s1083, 32
        %s1085 = smul.addr %s1084, 8
        %s1086 = scalar_lea.vmem %s8, %s1085
        // Predicated region
        $region49: #{tpu_custom_call.1} parent=43 // pred_check
          %p1087 = pneg %p172
        $region50: #{tpu_custom_call.1} parent=43 // pred_check_branch
          %1089 = sbr.rel (%p1087) target = $region52
        $region51: #{tpu_custom_call.1} parent=43 // pred_region
          _
        $region52: #{tpu_custom_call.1} parent=43 // pred_fallthru
          _
        // Predicated region
        $region53: #{tpu_custom_call.1} parent=43 // pred_check
          %p1090 = pneg %p198
        $region54: #{tpu_custom_call.1} parent=43 // pred_check_branch
          %1092 = sbr.rel (%p1090) target = $region56
        $region55: #{tpu_custom_call.1} parent=43 // pred_region
          _
        $region56: #{tpu_custom_call.1} parent=43 // pred_fallthru
          _
        // Predicated region
        $region57: #{tpu_custom_call.1} parent=43 // pred_check
          %p1093 = pneg %p224
        $region58: #{tpu_custom_call.1} parent=43 // pred_check_branch
          %1095 = sbr.rel (%p1093) target = $region60
        $region59: #{tpu_custom_call.1} parent=43 // pred_region
          _
        $region60: #{tpu_custom_call.1} parent=43 // pred_fallthru
          _
      $region44: #{tpu_custom_call.1} parent=5 // pred_fallthru
        _
      %p1096 = scmp.le.s32.totalorder 2, %s18
      // Predicated region
      $region61: #{tpu_custom_call.1} parent=5 // pred_check
        %p1097 = pneg %p1096
      $region62: #{tpu_custom_call.1} parent=5 // pred_check_branch
        %1099 = sbr.rel (%p1097) target = $region64
      $region63: #{tpu_custom_call.1} parent=5 // pred_region
        %s1100 = ssub.s32 %s18, 2
        // Predicated region
        $region65: #{tpu_custom_call.1} parent=63 // pred_check
          %p1101 = pneg %p178
        $region66: #{tpu_custom_call.1} parent=63 // pred_check_branch
          %1103 = sbr.rel (%p1101) target = $region68
        $region67: #{tpu_custom_call.1} parent=63 // pred_region
          %p1104 = scmp.lt.s32.totalorder %s24, 1
          %s1105 = scalar_select %p1104, %s24, 1
          %s1106 = smul.addr %s1105, 32
          %s1107 = smul.addr %s1106, 8
          %s1108 = scalar_lea.vmem %s6, %s1107
        $region68: #{tpu_custom_call.1} parent=63 // pred_fallthru
          _
        // Predicated region
        $region69: #{tpu_custom_call.1} parent=63 // pred_check
          %p1109 = pneg %p204
        $region70: #{tpu_custom_call.1} parent=63 // pred_check_branch
          %1111 = sbr.rel (%p1109) target = $region72
        $region71: #{tpu_custom_call.1} parent=63 // pred_region
          %p1112 = scmp.lt.s32.totalorder %s24, 1
          %s1113 = scalar_select %p1112, %s24, 1
          %s1114 = smul.addr %s1113, 32
          %s1115 = smul.addr %s1114, 8
          %s1116 = scalar_lea.vmem %s7, %s1115
        $region72: #{tpu_custom_call.1} parent=63 // pred_fallthru
          _
        // Predicated region
        $region73: #{tpu_custom_call.1} parent=63 // pred_check
          %p1117 = pneg %p230
        $region74: #{tpu_custom_call.1} parent=63 // pred_check_branch
          %1119 = sbr.rel (%p1117) target = $region76
        $region75: #{tpu_custom_call.1} parent=63 // pred_region
          %p1120 = scmp.lt.s32.totalorder %s24, 1
          %s1121 = scalar_select %p1120, %s24, 1
          %s1122 = smul.addr %s1121, 32
          %s1123 = smul.addr %s1122, 8
          %s1124 = scalar_lea.vmem %s8, %s1123
        $region76: #{tpu_custom_call.1} parent=63 // pred_fallthru
          _
      $region64: #{tpu_custom_call.1} parent=5 // pred_fallthru
        _
    $region6: #{tpu_custom_call.1} parent=1 // loop_footer
      %s22 = sadd.s32 1, %s18
    $region7: #{tpu_custom_call.1} parent=1 // loop_footer_branch
      %17 = sbr.rel target = $region3
    $region8: #{tpu_custom_call.1} parent=1 // loop_exit
      _
    %1125 = vsyncpa [#allocation3], 1
    %s1126 = scalar_lea.sflag [#allocation3], 1
    %1127 = vsyncpa %s1126, 1

</llo_original>
